<compile_context>
chip_gen: v7x
topology: tpu7x:2x2x1
jax: 0.10.0
libtpu: 0.0.40
codegen_flags: <defaults>
</compile_context>

<pallas_src>
import numpy as np
import jax
import jax.numpy as jnp
from jax.experimental import pallas as pl
from jax.experimental.pallas import tpu as pltpu


def _linear_layer_kernel(off_ref, xT_ref, tableT_ref, biasT_ref, outT_ref):
    # off_ref:    (F,)   int32, SMEM (scalar-prefetched)
    # xT_ref:     (F, tb) int32   -- batch on lanes
    # tableT_ref: (D, V)  float32 -- resident, transposed embedding table
    # biasT_ref:  (D, 1)  float32
    # outT_ref:   (D, tb) float32 -- lane-dense output tile
    F, tb = xT_ref.shape
    D, V = tableT_ref.shape

    vocab = jax.lax.broadcasted_iota(jnp.int32, (V, 1), 0)        # (V, 1)

    # counts[v, b] = #{f : x[b, f] + off[f] == v}   (2-D, no (tb,F,V) blowup)
    counts = jnp.zeros((V, tb), jnp.float32)
    for f in range(F):                       # F is small & static -> fully unrolled
        row = xT_ref[pl.ds(f, 1), :] + off_ref[f]                  # (1, tb) int32
        counts = counts + (row == vocab).astype(jnp.float32)       # lane-dense compare

    # Embedding gather + sum over fields == table^T @ counts (exact, linear).
    # MXU: M=D, K=V, N=tb (>=128 when tiled) -> real MXU column utilization.
    outT = jnp.dot(tableT_ref[...], counts, preferred_element_type=jnp.float32)
    outT_ref[...] = outT + biasT_ref[...]                          # (D, tb)


def linear_layer_forward(x, table, bias, offsets, *, tb=128):
    """x: (B, F) int; table: (V, D) f32; bias: (D,) f32; offsets: (F,) int -> (B, D) f32."""
    B, F = x.shape
    V, D = table.shape

    # Batch tile: full batch if small, otherwise lane-aligned 128-wide tiles.
    if B <= tb:
        tb_eff, B_pad = B, B
    else:
        tb_eff = tb
        assert tb_eff % 128 == 0, "batch tile must be a multiple of 128 lanes"
        B_pad = pl.cdiv(B, tb_eff) * tb_eff

    x = x.astype(jnp.int32)
    if B_pad != B:
        # Pad with index 0 (always in-range); padded rows are sliced off below.
        x = jnp.pad(x, ((0, B_pad - B), (0, 0)))

    x_t = x.T                                         # (F, B_pad): batch on lanes
    table_t = table.astype(jnp.float32).T             # (D, V)
    bias_t = bias.astype(jnp.float32).reshape(D, 1)   # (D, 1)
    offsets = offsets.astype(jnp.int32)               # (F,) -> SMEM via scalar prefetch

    grid = (B_pad // tb_eff,)
    cost = pl.CostEstimate(
        flops=2 * B_pad * V * D + B_pad * F * V,
        transcendentals=0,
        bytes_accessed=4 * (x_t.size + table_t.size + bias_t.size + B_pad * D + F),
    )

    out_t = pl.pallas_call(
        _linear_layer_kernel,
        out_shape=jax.ShapeDtypeStruct((D, B_pad), jnp.float32),
        grid_spec=pltpu.PrefetchScalarGridSpec(
            num_scalar_prefetch=1,                                   # offsets -> SMEM
            grid=grid,
            in_specs=[
                pl.BlockSpec((F, tb_eff), lambda i, off: (0, i)),    # x^T tile
                pl.BlockSpec((D, V),      lambda i, off: (0, 0)),    # resident table^T
                pl.BlockSpec((D, 1),      lambda i, off: (0, 0)),    # bias
            ],
            out_specs=pl.BlockSpec((D, tb_eff), lambda i, off: (0, i)),
        ),
        compiler_params=pltpu.CompilerParams(
            dimension_semantics=("parallel",),   # batch tiles shard across TCs (v7x)
            vmem_limit_bytes=32 * 1024 * 1024,   # explicit budget, safe on v5e/v6e/v7x
        ),
        cost_estimate=cost,
    )(offsets, x_t, table_t, bias_t)

    return out_t.T[:B]                            # (B, D)


if __name__ == "__main__":
    # Module config: num_features = per-field vocab sizes, output_dim = D.
    num_features = (8, 16, 12, 24)          # F = 4 feature fields
    output_dim = 1
    F = len(num_features)
    V = int(sum(num_features)) + 2          # matches Embedding(sum(num_features)+2, D)
    D = output_dim
    B = 256                                 # 2 x 128-lane batch tiles -> real grid

    key = jax.random.PRNGKey(0)
    k_table, k_x = jax.random.split(key)

    # Deterministic parameter init (nn.Embedding default ~ N(0,1); bias zeros).
    table = jax.random.normal(k_table, (V, D), dtype=jnp.float32)
    bias = jnp.zeros((D,), dtype=jnp.float32)
    offsets = jnp.asarray(
        np.array((0, *np.cumsum(num_features)[:-1])), dtype=jnp.int32)  # (F,)

    # Example input: x[:, f] in [0, num_features[f])
    maxes = jnp.asarray(num_features, dtype=jnp.int32)
    u = jax.random.uniform(k_x, (B, F))
    x = jnp.floor(u * maxes.astype(jnp.float32)).astype(jnp.int32)

    out = jax.block_until_ready(linear_layer_forward(x, table, bias, offsets))

    # Pure-JAX reference for sanity.
    adj = x + offsets[None, :]
    ref = jnp.sum(table[adj], axis=1) + bias
    assert out.shape == (B, D)
    assert np.allclose(np.asarray(out), np.asarray(ref), atol=1e-5, rtol=1e-5)

    print("KERNEL_OK")
</pallas_src>

<mosaic_0001>
module attributes {stable_mosaic.version = 11 : i64} {
  func.func @_linear_layer_kernel(%arg0: i32, %arg1: memref<4xi32, #tpu.memory_space<smem>>, %arg2: memref<4x128xi32, #tpu.memory_space<vmem>>, %arg3: memref<1x62xf32, #tpu.memory_space<vmem>>, %arg4: memref<1x1xf32, #tpu.memory_space<vmem>>, %arg5: memref<1x128xf32, #tpu.memory_space<vmem>>) attributes {dimension_semantics = [#tpu.dimension_semantics<parallel>], iteration_bounds = array<i64: 2>, scalar_prefetch = 1 : i64, scratch_operands = 0 : i64, tpu.core_type = #tpu.core_type<tc>, window_params = [{transform_indices = @transform_0, window_bounds = array<i64: 4, 128>}, {pipeline_mode = #tpu.pipeline_mode<synchronous>, transform_indices = @transform_1, window_bounds = array<i64: 1, 62>}, {pipeline_mode = #tpu.pipeline_mode<synchronous>, transform_indices = @transform_2, window_bounds = array<i64: 1, 1>}, {transform_indices = @transform_3, window_bounds = array<i64: 1, 128>}]} {
    %0 = tpu.iota {dimensions = array<i32: 0>} : vector<62x1xi32>
    %cst = arith.constant 0.000000e+00 : f32
    %1 = vector.broadcast %cst : f32 to vector<62x128xf32>
    %c0 = arith.constant 0 : index
    %c0_0 = arith.constant 0 : index
    %2 = vector.load %arg2[%c0, %c0_0] : memref<4x128xi32, #tpu.memory_space<vmem>>, vector<1x128xi32>
    %c0_1 = arith.constant 0 : index
    %3 = memref.load %arg1[%c0_1] : memref<4xi32, #tpu.memory_space<smem>>
    %4 = vector.broadcast %3 : i32 to vector<1x128xi32>
    %5 = arith.addi %2, %4 : vector<1x128xi32>
    %6 = vector.broadcast %5 : vector<1x128xi32> to vector<62x128xi32>
    %7 = vector.broadcast %0 : vector<62x1xi32> to vector<62x128xi32>
    %8 = arith.cmpi eq, %6, %7 : vector<62x128xi32>
    %9 = arith.extui %8 : vector<62x128xi1> to vector<62x128xi32>
    %10 = arith.sitofp %9 : vector<62x128xi32> to vector<62x128xf32>
    %11 = arith.addf %1, %10 : vector<62x128xf32>
    %c1 = arith.constant 1 : index
    %c0_2 = arith.constant 0 : index
    %12 = vector.load %arg2[%c1, %c0_2] : memref<4x128xi32, #tpu.memory_space<vmem>>, vector<1x128xi32>
    %c1_3 = arith.constant 1 : index
    %13 = memref.load %arg1[%c1_3] : memref<4xi32, #tpu.memory_space<smem>>
    %14 = vector.broadcast %13 : i32 to vector<1x128xi32>
    %15 = arith.addi %12, %14 : vector<1x128xi32>
    %16 = vector.broadcast %15 : vector<1x128xi32> to vector<62x128xi32>
    %17 = vector.broadcast %0 : vector<62x1xi32> to vector<62x128xi32>
    %18 = arith.cmpi eq, %16, %17 : vector<62x128xi32>
    %19 = arith.extui %18 : vector<62x128xi1> to vector<62x128xi32>
    %20 = arith.sitofp %19 : vector<62x128xi32> to vector<62x128xf32>
    %21 = arith.addf %11, %20 : vector<62x128xf32>
    %c2 = arith.constant 2 : index
    %c0_4 = arith.constant 0 : index
    %22 = vector.load %arg2[%c2, %c0_4] : memref<4x128xi32, #tpu.memory_space<vmem>>, vector<1x128xi32>
    %c2_5 = arith.constant 2 : index
    %23 = memref.load %arg1[%c2_5] : memref<4xi32, #tpu.memory_space<smem>>
    %24 = vector.broadcast %23 : i32 to vector<1x128xi32>
    %25 = arith.addi %22, %24 : vector<1x128xi32>
    %26 = vector.broadcast %25 : vector<1x128xi32> to vector<62x128xi32>
    %27 = vector.broadcast %0 : vector<62x1xi32> to vector<62x128xi32>
    %28 = arith.cmpi eq, %26, %27 : vector<62x128xi32>
    %29 = arith.extui %28 : vector<62x128xi1> to vector<62x128xi32>
    %30 = arith.sitofp %29 : vector<62x128xi32> to vector<62x128xf32>
    %31 = arith.addf %21, %30 : vector<62x128xf32>
    %c3 = arith.constant 3 : index
    %c0_6 = arith.constant 0 : index
    %32 = vector.load %arg2[%c3, %c0_6] : memref<4x128xi32, #tpu.memory_space<vmem>>, vector<1x128xi32>
    %c3_7 = arith.constant 3 : index
    %33 = memref.load %arg1[%c3_7] : memref<4xi32, #tpu.memory_space<smem>>
    %34 = vector.broadcast %33 : i32 to vector<1x128xi32>
    %35 = arith.addi %32, %34 : vector<1x128xi32>
    %36 = vector.broadcast %35 : vector<1x128xi32> to vector<62x128xi32>
    %37 = vector.broadcast %0 : vector<62x1xi32> to vector<62x128xi32>
    %38 = arith.cmpi eq, %36, %37 : vector<62x128xi32>
    %39 = arith.extui %38 : vector<62x128xi1> to vector<62x128xi32>
    %40 = arith.sitofp %39 : vector<62x128xi32> to vector<62x128xf32>
    %41 = arith.addf %31, %40 : vector<62x128xf32>
    %c0_8 = arith.constant 0 : index
    %c0_9 = arith.constant 0 : index
    %42 = vector.load %arg3[%c0_8, %c0_9] : memref<1x62xf32, #tpu.memory_space<vmem>>, vector<1x62xf32>
    %cst_10 = arith.constant dense<0.000000e+00> : vector<1x128xf32>
    %43 = tpu.matmul %42, %41, %cst_10 {dimension_numbers = #tpu.dot_dimension_numbers<[1], [0], [0], [1], [0, 0, 1, 1], [], []>} : vector<1x62xf32>, vector<62x128xf32>, vector<1x128xf32> -> vector<1x128xf32>
    %c0_11 = arith.constant 0 : index
    %c0_12 = arith.constant 0 : index
    %44 = vector.load %arg4[%c0_11, %c0_12] : memref<1x1xf32, #tpu.memory_space<vmem>>, vector<1x1xf32>
    %45 = vector.broadcast %44 : vector<1x1xf32> to vector<1x128xf32>
    %46 = arith.addf %43, %45 : vector<1x128xf32>
    %c0_13 = arith.constant 0 : index
    %c0_14 = arith.constant 0 : index
    %47 = vector.load %arg5[%c0_13, %c0_14] : memref<1x128xf32, #tpu.memory_space<vmem>>, vector<1x128xf32>
    tpu.vector_store %arg5[%c0_13, %c0_14], %46 {strides = array<i32>} : memref<1x128xf32, #tpu.memory_space<vmem>>, vector<1x128xf32>,
    return
  }
  func.func @transform_0(%arg0: i32, %arg1: memref<4xi32, #tpu.memory_space<smem>>) -> (i32, i32) {
    %c0_i32 = arith.constant 0 : i32
    %c0_i32_0 = arith.constant 0 : i32
    return %c0_i32, %arg0 : i32, i32
  }
  func.func @transform_1(%arg0: i32, %arg1: memref<4xi32, #tpu.memory_space<smem>>) -> (i32, i32) {
    %c0_i32 = arith.constant 0 : i32
    %c0_i32_0 = arith.constant 0 : i32
    %c0_i32_1 = arith.constant 0 : i32
    return %c0_i32, %c0_i32_0 : i32, i32
  }
  func.func @transform_2(%arg0: i32, %arg1: memref<4xi32, #tpu.memory_space<smem>>) -> (i32, i32) {
    %c0_i32 = arith.constant 0 : i32
    %c0_i32_0 = arith.constant 0 : i32
    %c0_i32_1 = arith.constant 0 : i32
    return %c0_i32, %c0_i32_0 : i32, i32
  }
  func.func @transform_3(%arg0: i32, %arg1: memref<4xi32, #tpu.memory_space<smem>>) -> (i32, i32) {
    %c0_i32 = arith.constant 0 : i32
    %c0_i32_0 = arith.constant 0 : i32
    return %c0_i32, %arg0 : i32, i32
  }
}

</mosaic_0001>

<llo_original>
// kernel: tpu_custom_call.1
$region0: #{tpu_custom_call.1}
  #allocation0 [shape = 'u32[]', space=smem, size = 0x4, offset = 0x4, fixed_abs, tag = 'smem constant byte address 0x4 - core index']
  #allocation1 [shape = 'u32[144,128]{1,0:T(1,128)}', space=vmem, size = 0x12000, scoped, tag = 'internal scratch']
  #allocation2 [shape = 's32[1]{0}', space=sflag, size = 0x4, scoped, tag = 'scoped memory for tpu_custom_call.1']
  #allocation3 [shape = 'u8[512]{0}', space=smem, size = 0x200, scoped, tag = 'prefetched SMEM operand 0']
  #allocation4 [shape = 'f32[1,1]{1,0:T(1,128)S(1)}', space=vmem, size = 0x200, scoped, tag = 'scoped memory for tpu_custom_call.1']
  %s0 = inlined_call_operand.vmem [shape: s32[4], index: 0, kind: input, shape index: {}]
  %s1 = inlined_call_operand.hbm [shape: s32[4,256], index: 1, kind: input, shape index: {}]
  %s2 = inlined_call_operand.vmem [shape: f32[1,62], index: 2, kind: input, shape index: {}]
  %s3 = inlined_call_operand.<no memory space> [shape: f32[1,1], index: 3, kind: input, shape index: {}]
  %s4 = inlined_call_operand.hbm [shape: f32[1,256], index: 4, kind: output, shape index: {}]
  %s5 = sld [smem:[#allocation0]]
  $region49: #{tpu_custom_call.1} parent=0
    _
  %s7 = ssub.s32 1, %s5
  %s8 = scalar_select 0, %s7, %s5
  %s9 = sshll.u32 %s0, 4
  %s10 = int_to_ptr.vmem [resolvable:$true] %s9
  %12 = dma.vmem_to_smem %s10, 16, [#allocation3], [#allocation2]
  %v13 = vstv %s3
  %14 = vst [vmem:[#allocation4] sm:$0x1] %v13
  %15 = dma.done [#allocation2], 16
  %16 = sfence
  $region1: #{tpu_custom_call.1} parent=0
    #allocation5 [shape = 'u8[4096]{0}', space=vmem, size = 0x1000, scoped, tag = 'input window, operand 1']
    #allocation6 [shape = 's32[2]{0}', space=sflag, size = 0x8, scoped, tag = 'scoped memory for tpu_custom_call.1']
    #allocation7 [shape = 's32[2]{0}', space=sflag, size = 0x8, scoped, tag = 'scoped memory for tpu_custom_call.1']
    #allocation8 [shape = 'u8[1024]{0}', space=vmem, size = 0x400, scoped, tag = 'output window, operand 0']
    %17 = vsyncpa [#allocation6], 0
    %s18 = scalar_lea.sflag [#allocation6], 1
    %19 = vsyncpa %s18, 0
    %20 = vsyncpa [#allocation7], 0
    %s21 = scalar_lea.sflag [#allocation7], 1
    %22 = vsyncpa %s21, 0
    loop: start=0, step=1, limit=4
    $region2: #{tpu_custom_call.1} parent=1 // loop_pre_header
      _
    $region3: #{tpu_custom_call.1} parent=1 // loop_header
      %s24 = sphi 0, %s28
      %p25 = scmp.ge.s32.totalorder %s24, 4
      %s34 = sphi 0, %s36
      %s37 = sphi 0, %s34
      %s38 = sphi 0, %s37
      %s54 = sphi 0, %s38
      %s58 = sphi 0, %s58
      %s60 = sphi 0, %s58
      %s61 = sphi 0, %s60
      %s75 = sphi 0, %s61
      %s79 = sphi 0, %s79
      %s81 = sphi 0, %s79
      %s82 = sphi 0, %s81
      %s96 = sphi 0, %s82
      %s102 = sphi 0, %s104
      %s105 = sphi 0, %s102
      %s106 = sphi 0, %s105
      %s122 = sphi 0, %s106
    $region4: #{tpu_custom_call.1} parent=1 // loop_header_branch
      %27 = sbr.rel (%p25) target = $region8
    $region5: #{tpu_custom_call.1} parent=1 // loop_body
      %s29 = ssub.s32 %s24, 1
      %s30 = ssub.s32 %s24, 2
      %s31 = sadd.s32 %s24, 1
      %s32 = ssub.s32 %s24, %s31
      %p33 = scmp.eq.s32.totalorder %s32, 0
      %s35 = sadd.s32 %s34, 1
      %s36 = scalar_select %p33, %s34, %s35
      %p39 = pneg %p33
      %p40 = scmp.eq.s32.totalorder %s24, 1
      %p41 = por %p39, %p40
      %p42 = scmp.ne.s32.totalorder %s34, %s37
      %p43 = scmp.eq.s32.totalorder %s24, 0
      %p44 = por %p42, %p43
      %p45 = scmp.ne.s32.totalorder %s34, %s37
      %p46 = scmp.eq.s32.totalorder %s29, 1
      %p47 = por %p45, %p46
      %p48 = scmp.ne.s32.totalorder %s37, %s38
      %p49 = scmp.eq.s32.totalorder %s29, 0
      %p50 = por %p48, %p49
      %p51 = scmp.ne.s32.totalorder %s37, %s38
      %p52 = scmp.eq.s32.totalorder %s30, 1
      %p53 = por %p51, %p52
      %p55 = scmp.ne.s32.totalorder %s38, %s54
      %p56 = scmp.eq.s32.totalorder %s30, 0
      %p57 = por %p55, %p56
      %s59 = sadd.s32 %s58, 1
      %p62 = scmp.eq.s32.totalorder %s24, 1
      %p63 = scmp.ne.s32.totalorder %s58, %s60
      %p64 = scmp.eq.s32.totalorder %s24, 0
      %p65 = por %p63, %p64
      %p66 = scmp.ne.s32.totalorder %s58, %s60
      %p67 = scmp.eq.s32.totalorder %s29, 1
      %p68 = por %p66, %p67
      %p69 = scmp.ne.s32.totalorder %s60, %s61
      %p70 = scmp.eq.s32.totalorder %s29, 0
      %p71 = por %p69, %p70
      %p72 = scmp.ne.s32.totalorder %s60, %s61
      %p73 = scmp.eq.s32.totalorder %s30, 1
      %p74 = por %p72, %p73
      %p76 = scmp.ne.s32.totalorder %s61, %s75
      %p77 = scmp.eq.s32.totalorder %s30, 0
      %p78 = por %p76, %p77
      %s80 = sadd.s32 %s79, 1
      %p83 = scmp.eq.s32.totalorder %s24, 1
      %p84 = scmp.ne.s32.totalorder %s79, %s81
      %p85 = scmp.eq.s32.totalorder %s24, 0
      %p86 = por %p84, %p85
      %p87 = scmp.ne.s32.totalorder %s79, %s81
      %p88 = scmp.eq.s32.totalorder %s29, 1
      %p89 = por %p87, %p88
      %p90 = scmp.ne.s32.totalorder %s81, %s82
      %p91 = scmp.eq.s32.totalorder %s29, 0
      %p92 = por %p90, %p91
      %p93 = scmp.ne.s32.totalorder %s81, %s82
      %p94 = scmp.eq.s32.totalorder %s30, 1
      %p95 = por %p93, %p94
      %p97 = scmp.ne.s32.totalorder %s82, %s96
      %p98 = scmp.eq.s32.totalorder %s30, 0
      %p99 = por %p97, %p98
      %s100 = ssub.s32 %s24, %s31
      %p101 = scmp.eq.s32.totalorder %s100, 0
      %s103 = sadd.s32 %s102, 1
      %s104 = scalar_select %p101, %s102, %s103
      %p107 = pneg %p101
      %p108 = scmp.eq.s32.totalorder %s24, 1
      %p109 = por %p107, %p108
      %p110 = scmp.ne.s32.totalorder %s102, %s105
      %p111 = scmp.eq.s32.totalorder %s24, 0
      %p112 = por %p110, %p111
      %p113 = scmp.ne.s32.totalorder %s102, %s105
      %p114 = scmp.eq.s32.totalorder %s29, 1
      %p115 = por %p113, %p114
      %p116 = scmp.ne.s32.totalorder %s105, %s106
      %p117 = scmp.eq.s32.totalorder %s29, 0
      %p118 = por %p116, %p117
      %p119 = scmp.ne.s32.totalorder %s105, %s106
      %p120 = scmp.eq.s32.totalorder %s30, 1
      %p121 = por %p119, %p120
      %p123 = scmp.ne.s32.totalorder %s106, %s122
      %p124 = scmp.eq.s32.totalorder %s30, 0
      %p125 = por %p123, %p124
      %p126 = scmp.le.s32.totalorder 1, %s24
      %p127 = scmp.lt.s32.totalorder %s24, 3
      %p128 = pnand %p126, %p127
      %p129 = pneg %p128
      // Predicated region
      $region9: #{tpu_custom_call.1} parent=5 // pred_check
        _
      $region10: #{tpu_custom_call.1} parent=5 // pred_check_branch
        %131 = sbr.rel (%p128) target = $region12
      $region11: #{tpu_custom_call.1} parent=5 // pred_region
        %s132 = ssub.s32 %s24, 1
        // Predicated region
        $region13: #{tpu_custom_call.1} parent=11 // pred_check
          %p133 = pneg %p71
        $region14: #{tpu_custom_call.1} parent=11 // pred_check_branch
          %135 = sbr.rel (%p133) target = $region16
        $region15: #{tpu_custom_call.1} parent=11 // pred_region
          _
        $region16: #{tpu_custom_call.1} parent=11 // pred_fallthru
          _
        // Predicated region
        $region17: #{tpu_custom_call.1} parent=11 // pred_check
          %p136 = pneg %p92
        $region18: #{tpu_custom_call.1} parent=11 // pred_check_branch
          %138 = sbr.rel (%p136) target = $region20
        $region19: #{tpu_custom_call.1} parent=11 // pred_region
          _
        $region20: #{tpu_custom_call.1} parent=11 // pred_fallthru
          _
      $region12: #{tpu_custom_call.1} parent=5 // pred_fallthru
        _
      %p139 = scmp.lt.s32.totalorder %s24, 2
      // Predicated region
      $region21: #{tpu_custom_call.1} parent=5 // pred_check
        %p140 = pneg %p139
      $region22: #{tpu_custom_call.1} parent=5 // pred_check_branch
        %142 = sbr.rel (%p140) target = $region24
      $region23: #{tpu_custom_call.1} parent=5 // pred_region
        // Predicated region
        $region25: #{tpu_custom_call.1} parent=23 // pred_check
          %p143 = pneg %p44
        $region26: #{tpu_custom_call.1} parent=23 // pred_check_branch
          %145 = sbr.rel (%p143) target = $region28
        $region27: #{tpu_custom_call.1} parent=23 // pred_region
          %s146 = sand.u32 %s34, 1
          %s147 = scalar_lea.sflag [#allocation6], %s146
          %s148 = sand.u32 %s34, 1
          %s149 = smul.addr %s148, 4
          %s150 = scalar_lea.vmem [#allocation5], %s149
          %s152 = ssub.s32 64, 64
          %153 = vsyncadd %s147, %s152
          %s154 = smul.addr %s24, 64
          %s155 = scalar_lea.hbm %s1, %s154
          %s157 = sshll.u32 %s150, 4
          %s158 = int_to_ptr.vmem [resolvable:$true] %s157
          %160 = dma.hbm_to_vmem [thread:$0]  %s155, 64, %s158, %s147
        $region28: #{tpu_custom_call.1} parent=23 // pred_fallthru
          _
      $region24: #{tpu_custom_call.1} parent=5 // pred_fallthru
        _
      %p161 = scmp.le.s32.totalorder 1, %s24
      %p162 = scmp.lt.s32.totalorder %s24, 3
      %p163 = pnand %p161, %p162
      %p164 = pneg %p163
      // Predicated region
      $region29: #{tpu_custom_call.1} parent=5 // pred_check
        _
      $region30: #{tpu_custom_call.1} parent=5 // pred_check_branch
        %166 = sbr.rel (%p163) target = $region32
      $region31: #{tpu_custom_call.1} parent=5 // pred_region
        %s167 = ssub.s32 %s24, 1
        %s168 = sand.u32 %s37, 1
        %s169 = scalar_lea.sflag [#allocation6], %s168
        %s170 = sand.u32 %s37, 1
        %s171 = smul.addr %s170, 4
        %s172 = scalar_lea.vmem [#allocation5], %s171
        // Predicated region
        $region33: #{tpu_custom_call.1} parent=31 // pred_check
          %p173 = pneg %p50
        $region34: #{tpu_custom_call.1} parent=31 // pred_check_branch
          %175 = sbr.rel (%p173) target = $region36
        $region35: #{tpu_custom_call.1} parent=31 // pred_region
          %176 = dma.done %s169, 64
        $region36: #{tpu_custom_call.1} parent=31 // pred_fallthru
          _
        %s177 = sand.u32 %s37, 1
        %s178 = scalar_lea.sflag [#allocation6], %s177
        %s179 = sand.u32 %s37, 1
        %s180 = smul.addr %s179, 4
        %s181 = scalar_lea.vmem [#allocation5], %s180
        %p182 = pneg %p50
        %p183 = pneg %p47
        %p184 = pneg %p71
        %p185 = pneg %p68
        %p186 = pneg %p92
        %p187 = pneg %p89
        %p188 = pneg %p118
        %p189 = pneg %p115
        %s190 = sand.u32 %s105, 1
        %s191 = scalar_lea.sflag [#allocation7], %s190
        %s192 = sand.u32 %s105, 1
        %s193 = scalar_lea.vmem [#allocation8], %s192
        %v194 = vlaneseq
        %v195 = vshrl.u32 %v194, 7
        %v196 = vadd.s32 %v195, 8
        %v197 = vadd.s32 %v195, 16
        %v198 = vadd.s32 %v195, 24
        %v199 = vadd.s32 %v195, 32
        %v200 = vadd.s32 %v195, 40
        %v201 = vadd.s32 %v195, 48
        %v202 = vadd.s32 %v195, 56
        %v203 = vld [vmem:[%s172] sm:$0x1]
        %s204 = sld [smem:[#allocation3]]
        %v205 = vstv %s204
        %v206 = vadd.s32 %v203, %v205
        %v207 = vlaneseq
        %v208 = vshrl.u32 %v207, 7
        %v209 = vsub.s32 0, %v208
        %v210 = vrot.slane %v206, %v209
        %vm211 = vcmp.eq.s32.totalorder %v210, %v195
        %vm212 = vcmp.eq.s32.totalorder %v210, %v196
        %vm213 = vcmp.eq.s32.totalorder %v210, %v197
        %vm214 = vcmp.eq.s32.totalorder %v210, %v198
        %vm215 = vcmp.eq.s32.totalorder %v210, %v199
        %vm216 = vcmp.eq.s32.totalorder %v210, %v200
        %vm217 = vcmp.eq.s32.totalorder %v210, %v201
        %vm218 = vcmp.eq.s32.totalorder %v210, %v202
        %v219 = vsel %vm211, 1, 0
        %v220 = vsel %vm212, 1, 0
        %v221 = vsel %vm213, 1, 0
        %v222 = vsel %vm214, 1, 0
        %v223 = vsel %vm215, 1, 0
        %v224 = vsel %vm216, 1, 0
        %v225 = vsel %vm217, 1, 0
        %v226 = vsel %vm218, 1, 0
        %v227 = vcvt.s32.f32 %v219
        %v228 = vcvt.s32.f32 %v220
        %v229 = vcvt.s32.f32 %v221
        %v230 = vcvt.s32.f32 %v222
        %v231 = vcvt.s32.f32 %v223
        %v232 = vcvt.s32.f32 %v224
        %v233 = vcvt.s32.f32 %v225
        %v234 = vcvt.s32.f32 %v226
        %v235 = vadd.f32 %v227, 0.0
        %v236 = vadd.f32 %v228, 0.0
        %v237 = vadd.f32 %v229, 0.0
        %v238 = vadd.f32 %v230, 0.0
        %v239 = vadd.f32 %v231, 0.0
        %v240 = vadd.f32 %v232, 0.0
        %v241 = vadd.f32 %v233, 0.0
        %v242 = vadd.f32 %v234, 0.0
        %v243 = vld [vmem:[%s172 + $0x1] sm:$0x1]
        %s244 = sld [smem:[#allocation3 + $0x1]]
        %v245 = vstv %s244
        %v246 = vadd.s32 %v243, %v245
        %v247 = vlaneseq
        %v248 = vshrl.u32 %v247, 7
        %v249 = vsub.s32 0, %v248
        %v250 = vrot.slane %v246, %v249
        %vm251 = vcmp.eq.s32.totalorder %v250, %v195
        %vm252 = vcmp.eq.s32.totalorder %v250, %v196
        %vm253 = vcmp.eq.s32.totalorder %v250, %v197
        %vm254 = vcmp.eq.s32.totalorder %v250, %v198
        %vm255 = vcmp.eq.s32.totalorder %v250, %v199
        %vm256 = vcmp.eq.s32.totalorder %v250, %v200
        %vm257 = vcmp.eq.s32.totalorder %v250, %v201
        %vm258 = vcmp.eq.s32.totalorder %v250, %v202
        %v259 = vsel %vm251, 1, 0
        %v260 = vsel %vm252, 1, 0
        %v261 = vsel %vm253, 1, 0
        %v262 = vsel %vm254, 1, 0
        %v263 = vsel %vm255, 1, 0
        %v264 = vsel %vm256, 1, 0
        %v265 = vsel %vm257, 1, 0
        %v266 = vsel %vm258, 1, 0
        %v267 = vcvt.s32.f32 %v259
        %v268 = vcvt.s32.f32 %v260
        %v269 = vcvt.s32.f32 %v261
        %v270 = vcvt.s32.f32 %v262
        %v271 = vcvt.s32.f32 %v263
        %v272 = vcvt.s32.f32 %v264
        %v273 = vcvt.s32.f32 %v265
        %v274 = vcvt.s32.f32 %v266
        %v275 = vadd.f32 %v235, %v267
        %v276 = vadd.f32 %v236, %v268
        %v277 = vadd.f32 %v237, %v269
        %v278 = vadd.f32 %v238, %v270
        %v279 = vadd.f32 %v239, %v271
        %v280 = vadd.f32 %v240, %v272
        %v281 = vadd.f32 %v241, %v273
        %v282 = vadd.f32 %v242, %v274
        %v283 = vld [vmem:[%s172 + $0x2] sm:$0x1]
        %s284 = sld [smem:[#allocation3 + $0x2]]
        %v285 = vstv %s284
        %v286 = vadd.s32 %v283, %v285
        %v287 = vlaneseq
        %v288 = vshrl.u32 %v287, 7
        %v289 = vsub.s32 0, %v288
        %v290 = vrot.slane %v286, %v289
        %vm291 = vcmp.eq.s32.totalorder %v290, %v195
        %vm292 = vcmp.eq.s32.totalorder %v290, %v196
        %vm293 = vcmp.eq.s32.totalorder %v290, %v197
        %vm294 = vcmp.eq.s32.totalorder %v290, %v198
        %vm295 = vcmp.eq.s32.totalorder %v290, %v199
        %vm296 = vcmp.eq.s32.totalorder %v290, %v200
        %vm297 = vcmp.eq.s32.totalorder %v290, %v201
        %vm298 = vcmp.eq.s32.totalorder %v290, %v202
        %v299 = vsel %vm291, 1, 0
        %v300 = vsel %vm292, 1, 0
        %v301 = vsel %vm293, 1, 0
        %v302 = vsel %vm294, 1, 0
        %v303 = vsel %vm295, 1, 0
        %v304 = vsel %vm296, 1, 0
        %v305 = vsel %vm297, 1, 0
        %v306 = vsel %vm298, 1, 0
        %v307 = vcvt.s32.f32 %v299
        %v308 = vcvt.s32.f32 %v300
        %v309 = vcvt.s32.f32 %v301
        %v310 = vcvt.s32.f32 %v302
        %v311 = vcvt.s32.f32 %v303
        %v312 = vcvt.s32.f32 %v304
        %v313 = vcvt.s32.f32 %v305
        %v314 = vcvt.s32.f32 %v306
        %v315 = vadd.f32 %v275, %v307
        %v316 = vadd.f32 %v276, %v308
        %v317 = vadd.f32 %v277, %v309
        %v318 = vadd.f32 %v278, %v310
        %v319 = vadd.f32 %v279, %v311
        %v320 = vadd.f32 %v280, %v312
        %v321 = vadd.f32 %v281, %v313
        %v322 = vadd.f32 %v282, %v314
        %v323 = vld [vmem:[%s172 + $0x3] sm:$0x1]
        %s324 = sld [smem:[#allocation3 + $0x3]]
        %v325 = vstv %s324
        %v326 = vadd.s32 %v323, %v325
        %v327 = vlaneseq
        %v328 = vshrl.u32 %v327, 7
        %v329 = vsub.s32 0, %v328
        %v330 = vrot.slane %v326, %v329
        %vm331 = vcmp.eq.s32.totalorder %v330, %v195
        %vm332 = vcmp.eq.s32.totalorder %v330, %v196
        %vm333 = vcmp.eq.s32.totalorder %v330, %v197
        %vm334 = vcmp.eq.s32.totalorder %v330, %v198
        %vm335 = vcmp.eq.s32.totalorder %v330, %v199
        %vm336 = vcmp.eq.s32.totalorder %v330, %v200
        %vm337 = vcmp.eq.s32.totalorder %v330, %v201
        %vm338 = vcmp.eq.s32.totalorder %v330, %v202
        %v339 = vsel %vm331, 1, 0
        %v340 = vsel %vm332, 1, 0
        %v341 = vsel %vm333, 1, 0
        %v342 = vsel %vm334, 1, 0
        %v343 = vsel %vm335, 1, 0
        %v344 = vsel %vm336, 1, 0
        %v345 = vsel %vm337, 1, 0
        %v346 = vsel %vm338, 1, 0
        %v347 = vcvt.s32.f32 %v339
        %v348 = vcvt.s32.f32 %v340
        %v349 = vcvt.s32.f32 %v341
        %v350 = vcvt.s32.f32 %v342
        %v351 = vcvt.s32.f32 %v343
        %v352 = vcvt.s32.f32 %v344
        %v353 = vcvt.s32.f32 %v345
        %v354 = vcvt.s32.f32 %v346
        %v355 = vadd.f32 %v315, %v347
        %v356 = vadd.f32 %v316, %v348
        %v357 = vadd.f32 %v317, %v349
        %v358 = vadd.f32 %v318, %v350
        %v359 = vadd.f32 %v319, %v351
        %v360 = vadd.f32 %v320, %v352
        %v361 = vadd.f32 %v321, %v353
        %v362 = vadd.f32 %v322, %v354
        %v363 = vld [vmem:[%s2] sm:$0x1]
        %v364 = vld [vmem:[#allocation4] sm:$0x1]
        %366 = vset.pattern.permute.xlu0 0
        %367 = vperm.xlu0 %366, %v364
        %v368 = vpop.permute.xlu0 %367
        %v370 = vlaneseq
        %v371 = vshrl.u32 %v370, 7
        %v372 = vsub.s32 0, %v371
        %v373 = vrot.slane %v368, %v372
        %vm374 = vcmask 506880
        %v376 = vsel %vm374, %v363, 0
        %vm378 = vcmask 1045504
        %v380 = vsel %vm378, %v362, 0
        %382 = vmatprep.subr.mxu0 0.0
        %383 = vmatpush1.msra.mxu0 %v355
        %384 = vmatprep.subr.mxu0 0.0
        %385 = vmatpush1.msra.mxu0 %v356
        %386 = vmatprep.subr.mxu0 0.0
        %387 = vmatpush1.msra.mxu0 %v357
        %388 = vmatprep.subr.mxu0 0.0
        %389 = vmatpush1.msra.mxu0 %v358
        %390 = vmatprep.subr.mxu0 0.0
        %391 = vmatpush1.msra.mxu0 %v359
        %392 = vmatprep.subr.mxu0 0.0
        %393 = vmatpush1.msra.mxu0 %v360
        %394 = vmatprep.subr.mxu0 0.0
        %395 = vmatpush1.msra.mxu0 %v361
        %396 = vmatprep.subr.mxu0 0.0
        %397 = vmatpush1.msra.mxu0 %v380
        %398 = vmatprep.subr.mxu0 0.0
        %399 = vmatpush1.msra.mxu0 0.0
        %400 = vmatprep.subr.mxu0 0.0
        %401 = vmatpush1.msra.mxu0 0.0
        %402 = vmatprep.subr.mxu0 0.0
        %403 = vmatpush1.msra.mxu0 0.0
        %404 = vmatprep.subr.mxu0 0.0
        %405 = vmatpush1.msra.mxu0 0.0
        %406 = vmatprep.subr.mxu0 0.0
        %407 = vmatpush1.msra.mxu0 0.0
        %408 = vmatprep.subr.mxu0 0.0
        %409 = vmatpush1.msra.mxu0 0.0
        %410 = vmatprep.subr.mxu0 0.0
        %411 = vmatpush1.msra.mxu0 0.0
        %412 = vmatprep.subr.mxu0 0.0
        %413 = vmatpush1.msra.mxu0 0.0
        %414 = vmatprep.subr.mxu0 0.0
        %415 = vmatpush1.msra.mxu0 0.0
        %416 = vmatprep.subr.mxu0 0.0
        %417 = vmatpush1.msra.mxu0 0.0
        %418 = vmatprep.subr.mxu0 0.0
        %419 = vmatpush1.msra.mxu0 0.0
        %420 = vmatprep.subr.mxu0 0.0
        %421 = vmatpush1.msra.mxu0 0.0
        %422 = vmatprep.subr.mxu0 0.0
        %423 = vmatpush1.msra.mxu0 0.0
        %424 = vmatprep.subr.mxu0 0.0
        %425 = vmatpush1.msra.mxu0 0.0
        %426 = vmatprep.subr.mxu0 0.0
        %427 = vmatpush1.msra.mxu0 0.0
        %428 = vmatprep.subr.mxu0 0.0
        %429 = vmatpush1.msra.mxu0 0.0
        %430 = vmatprep.subr.mxu0 0.0
        %431 = vmatpush1.msra.mxu0 0.0
        %432 = vmatprep.subr.mxu0 0.0
        %433 = vmatpush1.msra.mxu0 0.0
        %434 = vmatprep.subr.mxu0 0.0
        %435 = vmatpush1.msra.mxu0 0.0
        %436 = vmatprep.subr.mxu0 0.0
        %437 = vmatpush1.msra.mxu0 0.0
        %438 = vmatprep.subr.mxu0 0.0
        %439 = vmatpush1.msra.mxu0 0.0
        %440 = vmatprep.subr.mxu0 0.0
        %441 = vmatpush1.msra.mxu0 0.0
        %442 = vmatprep.subr.mxu0 0.0
        %443 = vmatpush1.msra.mxu0 0.0
        %444 = vmatprep.subr.mxu0 0.0
        %445 = vmatpush1.msra.mxu0 0.0
        %446 = vmatprep.mubr.f32.mxu0 0.0
        %447 = vmatmul.mubr.f32.gmra.mrb[0].mxu0 %v376
        %v448 = vpop.f32.mrb[0].mxu0
        %v449 = vadd.f32 %v373, %v448
        %v450 = vpop.f32.mrb[0].mxu0
        %451 = vdwg.mxu0
        %452 = vst [vmem:[%s193] sm:$0x1] %v449
        %s453 = sand.u32 %s105, 1
        %s454 = scalar_lea.sflag [#allocation7], %s453
        %s455 = sand.u32 %s105, 1
        %s456 = scalar_lea.vmem [#allocation8], %s455
        // Predicated region
        $region37: #{tpu_custom_call.1} parent=31 // pred_check
          %p457 = pneg %p115
        $region38: #{tpu_custom_call.1} parent=31 // pred_check_branch
          %459 = sbr.rel (%p457) target = $region40
        $region39: #{tpu_custom_call.1} parent=31 // pred_region
          %s461 = ssub.s32 16, 16
          %462 = vsyncadd %s454, %s461
          %s463 = smul.addr %s29, 16
          %s464 = scalar_lea.hbm %s4, %s463
          %s466 = sshll.u32 %s456, 4
          %s467 = int_to_ptr.vmem [resolvable:$true] %s466
          %469 = dma.vmem_to_hbm [thread:$0]  %s467, 16, %s464, %s454
        $region40: #{tpu_custom_call.1} parent=31 // pred_fallthru
          _
      $region32: #{tpu_custom_call.1} parent=5 // pred_fallthru
        _
      %p470 = scmp.le.s32.totalorder 2, %s24
      // Predicated region
      $region41: #{tpu_custom_call.1} parent=5 // pred_check
        %p471 = pneg %p470
      $region42: #{tpu_custom_call.1} parent=5 // pred_check_branch
        %473 = sbr.rel (%p471) target = $region44
      $region43: #{tpu_custom_call.1} parent=5 // pred_region
        %s474 = ssub.s32 %s24, 2
        // Predicated region
        $region45: #{tpu_custom_call.1} parent=43 // pred_check
          %p475 = pneg %p121
        $region46: #{tpu_custom_call.1} parent=43 // pred_check_branch
          %477 = sbr.rel (%p475) target = $region48
        $region47: #{tpu_custom_call.1} parent=43 // pred_region
          %s478 = sand.u32 %s106, 1
          %s479 = scalar_lea.sflag [#allocation7], %s478
          %s480 = sand.u32 %s106, 1
          %s481 = scalar_lea.vmem [#allocation8], %s480
          %482 = dma.done %s479, 16
        $region48: #{tpu_custom_call.1} parent=43 // pred_fallthru
          _
      $region44: #{tpu_custom_call.1} parent=5 // pred_fallthru
        _
    $region6: #{tpu_custom_call.1} parent=1 // loop_footer
      %s28 = sadd.s32 1, %s24
    $region7: #{tpu_custom_call.1} parent=1 // loop_footer_branch
      %23 = sbr.rel target = $region3
    $region8: #{tpu_custom_call.1} parent=1 // loop_exit
      _
    %483 = vsyncpa [#allocation6], 1
    %s484 = scalar_lea.sflag [#allocation6], 1
    %485 = vsyncpa %s484, 1
    %486 = vsyncpa [#allocation7], 1
    %s487 = scalar_lea.sflag [#allocation7], 1
    %488 = vsyncpa %s487, 1

</llo_original>
